<compile_context>
chip_gen: v5e
topology: v5e:2x2
jax: 0.10.0
libtpu: 0.0.40
codegen_flags: <defaults>
</compile_context>

<pallas_src>
import functools

import jax
import jax.numpy as jnp
from jax.experimental import pallas as pl
from jax.experimental.pallas import tpu as pltpu


def _conv_block_kernel(x_ref, w_ref, m_ref, o_ref, *, H, W, nb, eps, slope,
                       compute_dtype):
    P = H * W
    w = w_ref[...]          # (C_out, 9*C_in), compute_dtype
    m = m_ref[...]          # (9*C_in, P) f32 {0,1} tap-validity mask

    # Build the im2col stack for the nb samples of this grid step.
    cols = []
    for s in range(nb):
        x = x_ref[s].astype(jnp.float32)            # (C_in, P)
        taps = []
        for kh in range(3):
            for kw in range(3):
                sh = (kh - 1) * W + (kw - 1)        # y[:, p] = x[:, p + sh]
                if sh == 0:
                    taps.append(x)
                else:
                    # Circular lane rotation (XLU); wrapped positions are
                    # exactly the ones the mask zeroes.
                    taps.append(pltpu.roll(x, shift=(-sh) % P, axis=1))
        # Single masked pass over the whole (9*C_in, P) stack.
        cols.append(jnp.concatenate(taps, axis=0) * m)
    stack = cols[0] if nb == 1 else jnp.concatenate(cols, axis=1)  # (9*C_in, nb*P)

    # One fused MXU matmul: (C_out, 9*C_in) @ (9*C_in, nb*P), f32 accumulate.
    acc = jnp.dot(w, stack.astype(compute_dtype),
                  preferred_element_type=jnp.float32)              # (C_out, nb*P)

    # InstanceNorm2d (affine=False, biased variance) + LeakyReLU epilogue,
    # one-pass statistics per sample.
    inv_p = 1.0 / float(P)
    for s in range(nb):
        a = acc if nb == 1 else acc[:, s * P:(s + 1) * P]          # (C_out, P)
        mean = jnp.sum(a, axis=1, keepdims=True) * inv_p
        ex2 = jnp.sum(a * a, axis=1, keepdims=True) * inv_p
        var = jnp.maximum(ex2 - mean * mean, 0.0)
        y = (a - mean) * jax.lax.rsqrt(var + eps)
        y = jnp.where(y >= 0.0, y, slope * y)
        o_ref[s] = y.astype(o_ref.dtype)


def conv_block(x, weight, *, eps=1e-5, negative_slope=0.2,
               compute_dtype=jnp.bfloat16):
    """x: (N, C_in, H, W), weight: (C_out, C_in, 3, 3). Returns (N, C_out, H, W)."""
    n, c_in, h, w = x.shape
    c_out, c_in_w, kh, kw = weight.shape
    assert (kh, kw) == (3, 3) and c_in_w == c_in
    p = h * w
    # NOTE: p is a multiple of 128 here -> lane-dense, unmasked stores.
    # General shapes stay correct but stores become masked partial stores.

    # Batch folding: exactly 2 "parallel" grid steps when N is even (keeps both
    # v7x TensorCores busy; only 2 per-step overheads on single-TC v5e/v6e).
    if n >= 2 and n % 2 == 0:
        nb = n // 2
    else:
        nb = 1
    steps = n // nb

    # Free reshape: pixels onto the lane axis. No transpose / pad of activations.
    x2 = x.reshape(n, c_in, p)

    # Weight relayout to a single lane-dense tile: (C_out, C_in, 3, 3) ->
    # (C_out, 9*C_in) with column index t*C_in + ci, t = kh*3 + kw (tap-major,
    # matching the in-kernel im2col stack ordering).
    wf = jnp.transpose(weight, (0, 2, 3, 1)).reshape(c_out, 9 * c_in)
    wf = wf.astype(compute_dtype)

    # Per-tap validity masks expanded to (9*C_in, P): zero where the tap falls
    # outside the image (implements the conv zero padding and kills the
    # circular-roll wrap positions). Built once; tiny.
    rows = jnp.arange(h)
    cols = jnp.arange(w)
    mask_list = []
    for dkh in range(3):
        for dkw in range(3):
            dh, dw = dkh - 1, dkw - 1
            hv = (rows + dh >= 0) & (rows + dh < h)
            wv = (cols + dw >= 0) & (cols + dw < w)
            mask_list.append(
                (hv[:, None] & wv[None, :]).astype(jnp.float32).reshape(-1))
    masks = jnp.repeat(jnp.stack(mask_list, axis=0), c_in, axis=0)  # (9*C_in, P)

    kernel = functools.partial(_conv_block_kernel, H=h, W=w, nb=nb, eps=eps,
                               slope=negative_slope, compute_dtype=compute_dtype)

    itemsize = jnp.dtype(compute_dtype).itemsize
    cost = pl.CostEstimate(
        flops=2 * n * c_out * (9 * c_in) * p + 10 * n * c_out * p,
        transcendentals=n * c_out,
        bytes_accessed=(4 * n * c_in * p + 4 * n * c_out * p
                        + itemsize * c_out * 9 * c_in + 4 * 9 * c_in * p),
    )

    out = pl.pallas_call(
        kernel,
        out_shape=jax.ShapeDtypeStruct((n, c_out, p), jnp.float32),
        grid_spec=pltpu.PrefetchScalarGridSpec(
            num_scalar_prefetch=0,
            grid=(steps,),
            in_specs=[
                pl.BlockSpec((nb, c_in, p), lambda i: (i, 0, 0)),
                pl.BlockSpec((c_out, 9 * c_in), lambda i: (0, 0)),
                pl.BlockSpec((9 * c_in, p), lambda i: (0, 0)),
            ],
            out_specs=pl.BlockSpec((nb, c_out, p), lambda i: (i, 0, 0)),
        ),
        compiler_params=pltpu.CompilerParams(
            dimension_semantics=("parallel",),
        ),
        cost_estimate=cost,
    )(x2, wf, masks)

    return out.reshape(n, c_out, h, w)


def _reference_conv_block(x, weight, *, eps=1e-5, negative_slope=0.2,
                          conv_dtype=jnp.float32):
    """Pure-JAX reference matching the PyTorch ConvBlock forward."""
    out = jax.lax.conv_general_dilated(
        x.astype(conv_dtype), weight.astype(conv_dtype),
        window_strides=(1, 1), padding=((1, 1), (1, 1)),
        dimension_numbers=("NCHW", "OIHW", "NCHW"),
        preferred_element_type=jnp.float32)
    mean = jnp.mean(out, axis=(2, 3), keepdims=True)
    var = jnp.mean((out - mean) ** 2, axis=(2, 3), keepdims=True)
    y = (out - mean) / jnp.sqrt(var + eps)
    return jnp.where(y >= 0.0, y, negative_slope * y)


if __name__ == "__main__":
    key = jax.random.PRNGKey(0)
    k1, k2 = jax.random.split(key)

    n, c_in, h, w = 2, 4, 16, 16
    c_out = 32

    x = jax.random.normal(k1, (n, c_in, h, w), jnp.float32)
    weight = jax.random.normal(k2, (c_out, c_in, 3, 3), jnp.float32) * 0.1

    # 1) Bit-accurate path (f32 MXU operands) vs f32 reference — tight tolerance.
    ref_f32 = jax.block_until_ready(_reference_conv_block(x, weight))
    out_f32 = jax.block_until_ready(
        conv_block(x, weight, compute_dtype=jnp.float32))
    assert out_f32.shape == ref_f32.shape, (out_f32.shape, ref_f32.shape)
    assert jnp.allclose(out_f32, ref_f32, atol=1e-4, rtol=1e-4), float(
        jnp.max(jnp.abs(out_f32 - ref_f32)))

    # 2) Default fast path (bf16 MXU operands, f32 accumulation) vs a reference
    #    using the same operand precision — tight tolerance.
    ref_bf16 = jax.block_until_ready(
        _reference_conv_block(x, weight, conv_dtype=jnp.bfloat16))
    out_bf16 = jax.block_until_ready(conv_block(x, weight))
    assert out_bf16.shape == ref_bf16.shape, (out_bf16.shape, ref_bf16.shape)
    assert jnp.allclose(out_bf16, ref_bf16, atol=2e-3, rtol=2e-3), float(
        jnp.max(jnp.abs(out_bf16 - ref_bf16)))

    print("KERNEL_OK")
</pallas_src>

<mosaic_0001>
module attributes {stable_mosaic.version = 11 : i64} {
  func.func @_conv_block_kernel(%arg0: i32, %arg1: memref<1x4x256xf32, #tpu.memory_space<vmem>>, %arg2: memref<32x36xf32, #tpu.memory_space<vmem>>, %arg3: memref<36x256xf32, #tpu.memory_space<vmem>>, %arg4: memref<1x32x256xf32, #tpu.memory_space<vmem>>) attributes {dimension_semantics = [#tpu.dimension_semantics<parallel>], iteration_bounds = array<i64: 2>, scalar_prefetch = 0 : i64, scratch_operands = 0 : i64, tpu.core_type = #tpu.core_type<tc>, window_params = [{transform_indices = @transform_0, window_bounds = array<i64: 1, 4, 256>}, {pipeline_mode = #tpu.pipeline_mode<synchronous>, transform_indices = @transform_1, window_bounds = array<i64: 32, 36>}, {pipeline_mode = #tpu.pipeline_mode<synchronous>, transform_indices = @transform_2, window_bounds = array<i64: 36, 256>}, {transform_indices = @transform_3, window_bounds = array<i64: 1, 32, 256>}]} {
    %c0 = arith.constant 0 : index
    %c0_0 = arith.constant 0 : index
    %0 = vector.load %arg2[%c0, %c0_0] : memref<32x36xf32, #tpu.memory_space<vmem>>, vector<32x36xf32>
    %c0_1 = arith.constant 0 : index
    %c0_2 = arith.constant 0 : index
    %1 = vector.load %arg3[%c0_1, %c0_2] : memref<36x256xf32, #tpu.memory_space<vmem>>, vector<36x256xf32>
    %c0_3 = arith.constant 0 : index
    %c0_4 = arith.constant 0 : index
    %c0_5 = arith.constant 0 : index
    %2 = vector.load %arg1[%c0_3, %c0_4, %c0_5] : memref<1x4x256xf32, #tpu.memory_space<vmem>>, vector<1x4x256xf32>
    %3 = vector.shape_cast %2 : vector<1x4x256xf32> to vector<4x256xf32>
    %c17_i32 = arith.constant 17 : i32
    %4 = tpu.dynamic_rotate %3 by %c17_i32 dim 1 : vector<4x256xf32>, i32 -> vector<4x256xf32>
    %c16_i32 = arith.constant 16 : i32
    %5 = tpu.dynamic_rotate %3 by %c16_i32 dim 1 : vector<4x256xf32>, i32 -> vector<4x256xf32>
    %c15_i32 = arith.constant 15 : i32
    %6 = tpu.dynamic_rotate %3 by %c15_i32 dim 1 : vector<4x256xf32>, i32 -> vector<4x256xf32>
    %c1_i32 = arith.constant 1 : i32
    %7 = tpu.dynamic_rotate %3 by %c1_i32 dim 1 : vector<4x256xf32>, i32 -> vector<4x256xf32>
    %c255_i32 = arith.constant 255 : i32
    %8 = tpu.dynamic_rotate %3 by %c255_i32 dim 1 : vector<4x256xf32>, i32 -> vector<4x256xf32>
    %c241_i32 = arith.constant 241 : i32
    %9 = tpu.dynamic_rotate %3 by %c241_i32 dim 1 : vector<4x256xf32>, i32 -> vector<4x256xf32>
    %c240_i32 = arith.constant 240 : i32
    %10 = tpu.dynamic_rotate %3 by %c240_i32 dim 1 : vector<4x256xf32>, i32 -> vector<4x256xf32>
    %c239_i32 = arith.constant 239 : i32
    %11 = tpu.dynamic_rotate %3 by %c239_i32 dim 1 : vector<4x256xf32>, i32 -> vector<4x256xf32>
    %12 = tpu.concatenate %4, %5, %6, %7, %3, %8, %9, %10, %11 in 0 : vector<4x256xf32>, vector<4x256xf32>, vector<4x256xf32>, vector<4x256xf32>, vector<4x256xf32>, vector<4x256xf32>, vector<4x256xf32>, vector<4x256xf32>, vector<4x256xf32> -> vector<36x256xf32>
    %13 = arith.mulf %12, %1 : vector<36x256xf32>
    %cst = arith.constant dense<0.000000e+00> : vector<32x256xf32>
    %14 = tpu.matmul %0, %13, %cst {dimension_numbers = #tpu.dot_dimension_numbers<[1], [0], [0], [1], [0, 0, 1, 1], [], []>} : vector<32x36xf32>, vector<36x256xf32>, vector<32x256xf32> -> vector<32x256xf32>
    %cst_6 = arith.constant dense<0.000000e+00> : vector<32xf32>
    %15 = vector.multi_reduction <add>, %14, %cst_6 [1] : vector<32x256xf32> to vector<32xf32>
    %16 = vector.shape_cast %15 : vector<32xf32> to vector<32x1xf32>
    %cst_7 = arith.constant 3.906250e-03 : f32
    %17 = vector.broadcast %cst_7 : f32 to vector<32x1xf32>
    %18 = arith.mulf %16, %17 : vector<32x1xf32>
    %19 = arith.mulf %14, %14 : vector<32x256xf32>
    %cst_8 = arith.constant dense<0.000000e+00> : vector<32xf32>
    %20 = vector.multi_reduction <add>, %19, %cst_8 [1] : vector<32x256xf32> to vector<32xf32>
    %21 = vector.shape_cast %20 : vector<32xf32> to vector<32x1xf32>
    %cst_9 = arith.constant 3.906250e-03 : f32
    %22 = vector.broadcast %cst_9 : f32 to vector<32x1xf32>
    %23 = arith.mulf %21, %22 : vector<32x1xf32>
    %24 = arith.mulf %18, %18 : vector<32x1xf32>
    %25 = arith.subf %23, %24 : vector<32x1xf32>
    %cst_10 = arith.constant 0.000000e+00 : f32
    %26 = vector.broadcast %cst_10 : f32 to vector<32x1xf32>
    %27 = arith.maximumf %25, %26 : vector<32x1xf32>
    %28 = vector.broadcast %18 : vector<32x1xf32> to vector<32x256xf32>
    %29 = arith.subf %14, %28 : vector<32x256xf32>
    %cst_11 = arith.constant 9.99999974E-6 : f32
    %30 = vector.broadcast %cst_11 : f32 to vector<32x1xf32>
    %31 = arith.addf %27, %30 : vector<32x1xf32>
    %32 = math.rsqrt %31 : vector<32x1xf32>
    %33 = vector.broadcast %32 : vector<32x1xf32> to vector<32x256xf32>
    %34 = arith.mulf %29, %33 : vector<32x256xf32>
    %cst_12 = arith.constant 0.000000e+00 : f32
    %35 = vector.broadcast %cst_12 : f32 to vector<32x256xf32>
    %36 = arith.cmpf oge, %34, %35 : vector<32x256xf32>
    %cst_13 = arith.constant 2.000000e-01 : f32
    %37 = vector.broadcast %cst_13 : f32 to vector<32x256xf32>
    %38 = arith.mulf %37, %34 : vector<32x256xf32>
    %39 = arith.select %36, %34, %38 : vector<32x256xi1>, vector<32x256xf32>
    %c0_14 = arith.constant 0 : index
    %c0_15 = arith.constant 0 : index
    %c0_16 = arith.constant 0 : index
    %40 = vector.load %arg4[%c0_14, %c0_15, %c0_16] : memref<1x32x256xf32, #tpu.memory_space<vmem>>, vector<1x32x256xf32>
    %41 = vector.shape_cast %40 : vector<1x32x256xf32> to vector<32x256xf32>
    %42 = vector.shape_cast %39 : vector<32x256xf32> to vector<1x32x256xf32>
    tpu.vector_store %arg4[%c0_14, %c0_15, %c0_16], %42 {strides = array<i32>} : memref<1x32x256xf32, #tpu.memory_space<vmem>>, vector<1x32x256xf32>,
    return
  }
  func.func @transform_0(%arg0: i32) -> (i32, i32, i32) {
    %c0_i32 = arith.constant 0 : i32
    %c0_i32_0 = arith.constant 0 : i32
    %c0_i32_1 = arith.constant 0 : i32
    return %arg0, %c0_i32, %c0_i32_0 : i32, i32, i32
  }
  func.func @transform_1(%arg0: i32) -> (i32, i32) {
    %c0_i32 = arith.constant 0 : i32
    %c0_i32_0 = arith.constant 0 : i32
    %c0_i32_1 = arith.constant 0 : i32
    return %c0_i32, %c0_i32_0 : i32, i32
  }
  func.func @transform_2(%arg0: i32) -> (i32, i32) {
    %c0_i32 = arith.constant 0 : i32
    %c0_i32_0 = arith.constant 0 : i32
    %c0_i32_1 = arith.constant 0 : i32
    return %c0_i32, %c0_i32_0 : i32, i32
  }
  func.func @transform_3(%arg0: i32) -> (i32, i32, i32) {
    %c0_i32 = arith.constant 0 : i32
    %c0_i32_0 = arith.constant 0 : i32
    %c0_i32_1 = arith.constant 0 : i32
    return %arg0, %c0_i32, %c0_i32_0 : i32, i32, i32
  }
}

</mosaic_0001>

<llo_original>
// kernel: tpu_custom_call.1
$region0: #{tpu_custom_call.1}
  #allocation0 [shape = 'u32[]', space=smem, size = 0x4, offset = 0x4, fixed_abs, tag = 'smem constant byte address 0x4 - core index']
  #allocation1 [shape = 'u32[72,128]{1,0:T(1,128)}', space=vmem, size = 0x9000, scoped, tag = 'internal scratch']
  %s0 = inlined_call_operand.hbm [shape: f32[2,4,256], index: 0, kind: input, shape index: {}]
  %s1 = inlined_call_operand.hbm [shape: f32[32,36], index: 1, kind: input, shape index: {}]
  %s2 = inlined_call_operand.hbm [shape: f32[36,256], index: 2, kind: input, shape index: {}]
  %s3 = inlined_call_operand.hbm [shape: f32[2,32,256], index: 3, kind: output, shape index: {}]
  %s4 = sld [smem:[#allocation0]]
  $region57: #{tpu_custom_call.1} parent=0
    _
  %s6 = ssub.s32 1, %s4
  %s7 = scalar_select 0, %s6, %s4
  $region1: #{tpu_custom_call.1} parent=0
    #allocation2 [shape = 'u8[8192]{0}', space=vmem, size = 0x2000, scoped, tag = 'input window, operand 0']
    #allocation3 [shape = 's32[2]{0}', space=sflag, size = 0x8, scoped, tag = 'scoped memory for tpu_custom_call.1']
    #allocation4 [shape = 's32[2]{0}', space=sflag, size = 0x8, scoped, tag = 'scoped memory for tpu_custom_call.1']
    #allocation5 [shape = 'u8[16384]{0}', space=vmem, size = 0x4000, scoped, tag = 'input window, operand 1, single buffered']
    #allocation6 [shape = 's32[1]{0}', space=sflag, size = 0x4, scoped, tag = 'scoped memory for tpu_custom_call.1']
    #allocation7 [shape = 'u8[40960]{0}', space=vmem, size = 0xa000, scoped, tag = 'input window, operand 2, single buffered']
    #allocation8 [shape = 'u8[65536]{0}', space=vmem, size = 0x10000, scoped, tag = 'output window, operand 0']
    %8 = vsyncpa [#allocation3], 0
    %s9 = scalar_lea.sflag [#allocation3], 1
    %10 = vsyncpa %s9, 0
    %11 = vsyncpa [#allocation6], 0
    %12 = vsyncpa [#allocation4], 0
    %s13 = scalar_lea.sflag [#allocation4], 1
    %14 = vsyncpa %s13, 0
    loop: start=0, step=1, limit=4
    $region2: #{tpu_custom_call.1} parent=1 // loop_pre_header
      _
    $region3: #{tpu_custom_call.1} parent=1 // loop_header
      %s16 = sphi 0, %s20
      %p17 = scmp.ge.s32.totalorder %s16, 4
      %s26 = sphi 0, %s28
      %s29 = sphi 0, %s26
      %s30 = sphi 0, %s29
      %s46 = sphi 0, %s30
      %s50 = sphi 0, %s50
      %s52 = sphi 0, %s50
      %s53 = sphi 0, %s52
      %s67 = sphi 0, %s53
      %s71 = sphi 0, %s71
      %s73 = sphi 0, %s71
      %s74 = sphi 0, %s73
      %s88 = sphi 0, %s74
      %s94 = sphi 0, %s96
      %s97 = sphi 0, %s94
      %s98 = sphi 0, %s97
      %s114 = sphi 0, %s98
    $region4: #{tpu_custom_call.1} parent=1 // loop_header_branch
      %19 = sbr.rel (%p17) target = $region8
    $region5: #{tpu_custom_call.1} parent=1 // loop_body
      %s21 = ssub.s32 %s16, 1
      %s22 = ssub.s32 %s16, 2
      %s23 = sadd.s32 %s16, 1
      %s24 = ssub.s32 %s16, %s23
      %p25 = scmp.eq.s32.totalorder %s24, 0
      %s27 = sadd.s32 %s26, 1
      %s28 = scalar_select %p25, %s26, %s27
      %p31 = pneg %p25
      %p32 = scmp.eq.s32.totalorder %s16, 1
      %p33 = por %p31, %p32
      %p34 = scmp.ne.s32.totalorder %s26, %s29
      %p35 = scmp.eq.s32.totalorder %s16, 0
      %p36 = por %p34, %p35
      %p37 = scmp.ne.s32.totalorder %s26, %s29
      %p38 = scmp.eq.s32.totalorder %s21, 1
      %p39 = por %p37, %p38
      %p40 = scmp.ne.s32.totalorder %s29, %s30
      %p41 = scmp.eq.s32.totalorder %s21, 0
      %p42 = por %p40, %p41
      %p43 = scmp.ne.s32.totalorder %s29, %s30
      %p44 = scmp.eq.s32.totalorder %s22, 1
      %p45 = por %p43, %p44
      %p47 = scmp.ne.s32.totalorder %s30, %s46
      %p48 = scmp.eq.s32.totalorder %s22, 0
      %p49 = por %p47, %p48
      %s51 = sadd.s32 %s50, 1
      %p54 = scmp.eq.s32.totalorder %s16, 1
      %p55 = scmp.ne.s32.totalorder %s50, %s52
      %p56 = scmp.eq.s32.totalorder %s16, 0
      %p57 = por %p55, %p56
      %p58 = scmp.ne.s32.totalorder %s50, %s52
      %p59 = scmp.eq.s32.totalorder %s21, 1
      %p60 = por %p58, %p59
      %p61 = scmp.ne.s32.totalorder %s52, %s53
      %p62 = scmp.eq.s32.totalorder %s21, 0
      %p63 = por %p61, %p62
      %p64 = scmp.ne.s32.totalorder %s52, %s53
      %p65 = scmp.eq.s32.totalorder %s22, 1
      %p66 = por %p64, %p65
      %p68 = scmp.ne.s32.totalorder %s53, %s67
      %p69 = scmp.eq.s32.totalorder %s22, 0
      %p70 = por %p68, %p69
      %s72 = sadd.s32 %s71, 1
      %p75 = scmp.eq.s32.totalorder %s16, 1
      %p76 = scmp.ne.s32.totalorder %s71, %s73
      %p77 = scmp.eq.s32.totalorder %s16, 0
      %p78 = por %p76, %p77
      %p79 = scmp.ne.s32.totalorder %s71, %s73
      %p80 = scmp.eq.s32.totalorder %s21, 1
      %p81 = por %p79, %p80
      %p82 = scmp.ne.s32.totalorder %s73, %s74
      %p83 = scmp.eq.s32.totalorder %s21, 0
      %p84 = por %p82, %p83
      %p85 = scmp.ne.s32.totalorder %s73, %s74
      %p86 = scmp.eq.s32.totalorder %s22, 1
      %p87 = por %p85, %p86
      %p89 = scmp.ne.s32.totalorder %s74, %s88
      %p90 = scmp.eq.s32.totalorder %s22, 0
      %p91 = por %p89, %p90
      %s92 = ssub.s32 %s16, %s23
      %p93 = scmp.eq.s32.totalorder %s92, 0
      %s95 = sadd.s32 %s94, 1
      %s96 = scalar_select %p93, %s94, %s95
      %p99 = pneg %p93
      %p100 = scmp.eq.s32.totalorder %s16, 1
      %p101 = por %p99, %p100
      %p102 = scmp.ne.s32.totalorder %s94, %s97
      %p103 = scmp.eq.s32.totalorder %s16, 0
      %p104 = por %p102, %p103
      %p105 = scmp.ne.s32.totalorder %s94, %s97
      %p106 = scmp.eq.s32.totalorder %s21, 1
      %p107 = por %p105, %p106
      %p108 = scmp.ne.s32.totalorder %s97, %s98
      %p109 = scmp.eq.s32.totalorder %s21, 0
      %p110 = por %p108, %p109
      %p111 = scmp.ne.s32.totalorder %s97, %s98
      %p112 = scmp.eq.s32.totalorder %s22, 1
      %p113 = por %p111, %p112
      %p115 = scmp.ne.s32.totalorder %s98, %s114
      %p116 = scmp.eq.s32.totalorder %s22, 0
      %p117 = por %p115, %p116
      %p118 = scmp.le.s32.totalorder 1, %s16
      %p119 = scmp.lt.s32.totalorder %s16, 3
      %p120 = pnand %p118, %p119
      %p121 = pneg %p120
      // Predicated region
      $region9: #{tpu_custom_call.1} parent=5 // pred_check
        _
      $region10: #{tpu_custom_call.1} parent=5 // pred_check_branch
        %123 = sbr.rel (%p120) target = $region12
      $region11: #{tpu_custom_call.1} parent=5 // pred_region
        %s124 = ssub.s32 %s16, 1
        // Predicated region
        $region13: #{tpu_custom_call.1} parent=11 // pred_check
          %p125 = pneg %p63
        $region14: #{tpu_custom_call.1} parent=11 // pred_check_branch
          %127 = sbr.rel (%p125) target = $region16
        $region15: #{tpu_custom_call.1} parent=11 // pred_region
          %129 = vsyncadd [#allocation6], 0
          %s130 = sshll.u32 %s1, 4
          %s131 = int_to_ptr.hbm [resolvable:$true] %s130
          %s132 = sshll.u32 [#allocation5], 4
          %s133 = int_to_ptr.vmem [resolvable:$true] %s132
          %138 = dma.hbm_to_vmem [thread:$0]  %s131, 512, %s133, [#allocation6], 128, 128, 8
        $region16: #{tpu_custom_call.1} parent=11 // pred_fallthru
          _
        // Predicated region
        $region17: #{tpu_custom_call.1} parent=11 // pred_check
          %p139 = pneg %p84
        $region18: #{tpu_custom_call.1} parent=11 // pred_check_branch
          %141 = sbr.rel (%p139) target = $region20
        $region19: #{tpu_custom_call.1} parent=11 // pred_region
          %143 = vsyncadd [#allocation6], 0
          %s144 = sshll.u32 %s2, 4
          %s145 = int_to_ptr.hbm [resolvable:$true] %s144
          %s146 = sshll.u32 [#allocation7], 4
          %s147 = int_to_ptr.vmem [resolvable:$true] %s146
          %152 = dma.hbm_to_vmem [thread:$0]  %s145, 1280, %s147, [#allocation6], 256, 256, 16
        $region20: #{tpu_custom_call.1} parent=11 // pred_fallthru
          _
      $region12: #{tpu_custom_call.1} parent=5 // pred_fallthru
        _
      %p153 = scmp.lt.s32.totalorder %s16, 2
      // Predicated region
      $region21: #{tpu_custom_call.1} parent=5 // pred_check
        %p154 = pneg %p153
      $region22: #{tpu_custom_call.1} parent=5 // pred_check_branch
        %156 = sbr.rel (%p154) target = $region24
      $region23: #{tpu_custom_call.1} parent=5 // pred_region
        // Predicated region
        $region25: #{tpu_custom_call.1} parent=23 // pred_check
          %p157 = pneg %p36
        $region26: #{tpu_custom_call.1} parent=23 // pred_check_branch
          %159 = sbr.rel (%p157) target = $region28
        $region27: #{tpu_custom_call.1} parent=23 // pred_region
          %s160 = sand.u32 %s26, 1
          %s161 = scalar_lea.sflag [#allocation3], %s160
          %s162 = sand.u32 %s26, 1
          %s163 = smul.addr %s162, 8
          %s164 = scalar_lea.vmem [#allocation2], %s163
          %166 = vsyncadd %s161, 0
          %s167 = smul.addr %s16, 2
          %s168 = smul.addr %s167, 4
          %s169 = scalar_lea.hbm %s0, %s168
          %s171 = sshll.u32 %s169, 4
          %s172 = int_to_ptr.hbm [resolvable:$true] %s171
          %s173 = sshll.u32 %s164, 4
          %s174 = int_to_ptr.vmem [resolvable:$true] %s173
          %176 = dma.hbm_to_vmem [thread:$0]  %s172, 128, %s174, %s161
        $region28: #{tpu_custom_call.1} parent=23 // pred_fallthru
          _
      $region24: #{tpu_custom_call.1} parent=5 // pred_fallthru
        _
      %p177 = scmp.le.s32.totalorder 1, %s16
      %p178 = scmp.lt.s32.totalorder %s16, 3
      %p179 = pnand %p177, %p178
      %p180 = pneg %p179
      // Predicated region
      $region29: #{tpu_custom_call.1} parent=5 // pred_check
        _
      $region30: #{tpu_custom_call.1} parent=5 // pred_check_branch
        %182 = sbr.rel (%p179) target = $region32
      $region31: #{tpu_custom_call.1} parent=5 // pred_region
        %s183 = ssub.s32 %s16, 1
        %s184 = sand.u32 %s29, 1
        %s185 = scalar_lea.sflag [#allocation3], %s184
        %s186 = sand.u32 %s29, 1
        %s187 = smul.addr %s186, 8
        %s188 = scalar_lea.vmem [#allocation2], %s187
        // Predicated region
        $region33: #{tpu_custom_call.1} parent=31 // pred_check
          %p189 = pneg %p42
        $region34: #{tpu_custom_call.1} parent=31 // pred_check_branch
          %191 = sbr.rel (%p189) target = $region36
        $region35: #{tpu_custom_call.1} parent=31 // pred_region
          %193 = dma.done %s185, 128
        $region36: #{tpu_custom_call.1} parent=31 // pred_fallthru
          _
        // Predicated region
        $region37: #{tpu_custom_call.1} parent=31 // pred_check
          %p194 = pneg %p63
        $region38: #{tpu_custom_call.1} parent=31 // pred_check_branch
          %196 = sbr.rel (%p194) target = $region40
        $region39: #{tpu_custom_call.1} parent=31 // pred_region
          %198 = dma.done [#allocation6], 512
        $region40: #{tpu_custom_call.1} parent=31 // pred_fallthru
          _
        // Predicated region
        $region41: #{tpu_custom_call.1} parent=31 // pred_check
          %p199 = pneg %p84
        $region42: #{tpu_custom_call.1} parent=31 // pred_check_branch
          %201 = sbr.rel (%p199) target = $region44
        $region43: #{tpu_custom_call.1} parent=31 // pred_region
          %203 = dma.done [#allocation6], 1280
        $region44: #{tpu_custom_call.1} parent=31 // pred_fallthru
          _
        %s204 = sand.u32 %s29, 1
        %s205 = scalar_lea.sflag [#allocation3], %s204
        %s206 = sand.u32 %s29, 1
        %s207 = smul.addr %s206, 8
        %s208 = scalar_lea.vmem [#allocation2], %s207
        %p209 = pneg %p42
        %p210 = pneg %p39
        %p211 = pneg %p63
        %p212 = pneg %p60
        %p213 = pneg %p84
        %p214 = pneg %p81
        %p215 = pneg %p110
        %p216 = pneg %p107
        %s217 = sand.u32 %s97, 1
        %s218 = scalar_lea.sflag [#allocation4], %s217
        %s219 = sand.u32 %s97, 1
        %s220 = smul.addr %s219, 64
        %s221 = scalar_lea.vmem [#allocation8], %s220
        %v222 = vld [vmem:[#allocation5] sm:$0xff]
        %v223 = vld [vmem:[#allocation5 + $0x8] sm:$0xff]
        %v224 = vld [vmem:[#allocation5 + $0x10] sm:$0xff]
        %v225 = vld [vmem:[#allocation5 + $0x18] sm:$0xff]
        %v226 = vld [vmem:[#allocation7] sm:$0xff]
        %v227 = vld [vmem:[#allocation7 + $0x8] sm:$0xff]
        %v228 = vld [vmem:[#allocation7 + $0x10] sm:$0xff]
        %v229 = vld [vmem:[#allocation7 + $0x18] sm:$0xff]
        %v230 = vld [vmem:[#allocation7 + $0x20] sm:$0xff]
        %v231 = vld [vmem:[#allocation7 + $0x28] sm:$0xff]
        %v232 = vld [vmem:[#allocation7 + $0x30] sm:$0xff]
        %v233 = vld [vmem:[#allocation7 + $0x38] sm:$0xff]
        %v234 = vld [vmem:[#allocation7 + $0x40] sm:$0xf]
        %v235 = vld [vmem:[#allocation7 + $0x48] sm:$0xf]
        %v236 = vld [vmem:[%s188] sm:$0xff]
        %238 = vst [vmem:[#allocation1] ss:$2 sm:$0xff] %v236
        %v239 = vld.sshfl [vmem:[#allocation1] sm:$0xff pattern:$0x75316420]
        %v240 = vld.sshfl [vmem:[#allocation1 + $0x8] sm:$0xff pattern:$0x75316420]
        %243 = vrot.lane.b32.xlu0 %v239, 17
        %v244 = vpop.permute.xlu0 %243
        %245 = vrot.lane.b32.xlu0 %v240, 17
        %v246 = vpop.permute.xlu0 %245
        %v247 = vlaneseq
        %v248 = vand.u32 %v247, 127
        %vm249 = vcmp.lt.s32.totalorder %v248, 17
        %v250 = vsel %vm249, %v244, %v246
        %v251 = vsel %vm249, %v246, %v244
        %252 = vst [vmem:[#allocation1] ss:$2 sm:$0xff] %v236
        %v253 = vld.sshfl [vmem:[#allocation1] sm:$0xff pattern:$0x75316420]
        %v254 = vld.sshfl [vmem:[#allocation1 + $0x8] sm:$0xff pattern:$0x75316420]
        %257 = vrot.lane.b32.xlu0 %v253, 16
        %v258 = vpop.permute.xlu0 %257
        %259 = vrot.lane.b32.xlu0 %v254, 16
        %v260 = vpop.permute.xlu0 %259
        %vm261 = vcmp.lt.s32.totalorder %v248, 16
        %v262 = vsel %vm261, %v258, %v260
        %v263 = vsel %vm261, %v260, %v258
        %264 = vst [vmem:[#allocation1] ss:$2 sm:$0xff] %v236
        %v265 = vld.sshfl [vmem:[#allocation1] sm:$0xff pattern:$0x75316420]
        %v266 = vld.sshfl [vmem:[#allocation1 + $0x8] sm:$0xff pattern:$0x75316420]
        %269 = vrot.lane.b32.xlu0 %v265, 15
        %v270 = vpop.permute.xlu0 %269
        %271 = vrot.lane.b32.xlu0 %v266, 15
        %v272 = vpop.permute.xlu0 %271
        %vm273 = vcmp.lt.s32.totalorder %v248, 15
        %v274 = vsel %vm273, %v270, %v272
        %v275 = vsel %vm273, %v272, %v270
        %276 = vst [vmem:[#allocation1] ss:$2 sm:$0xff] %v236
        %v277 = vld.sshfl [vmem:[#allocation1] sm:$0xff pattern:$0x75316420]
        %v278 = vld.sshfl [vmem:[#allocation1 + $0x8] sm:$0xff pattern:$0x75316420]
        %281 = vrot.lane.b32.xlu0 %v277, 1
        %v282 = vpop.permute.xlu0 %281
        %283 = vrot.lane.b32.xlu0 %v278, 1
        %v284 = vpop.permute.xlu0 %283
        %vm285 = vcmp.lt.s32.totalorder %v248, 1
        %v286 = vsel %vm285, %v282, %v284
        %v287 = vsel %vm285, %v284, %v282
        %288 = vst [vmem:[#allocation1] ss:$2 sm:$0xff] %v236
        %v289 = vld.sshfl [vmem:[#allocation1] sm:$0xff pattern:$0x75316420]
        %v290 = vld.sshfl [vmem:[#allocation1 + $0x8] sm:$0xff pattern:$0x75316420]
        %293 = vrot.lane.b32.xlu0 %v289, 127
        %v294 = vpop.permute.xlu0 %293
        %295 = vrot.lane.b32.xlu0 %v290, 127
        %v296 = vpop.permute.xlu0 %295
        %vm297 = vcmp.lt.s32.totalorder %v248, 127
        %v298 = vsel %vm297, %v294, %v296
        %v299 = vsel %vm297, %v296, %v294
        %300 = vst [vmem:[#allocation1] ss:$2 sm:$0xff] %v236
        %v301 = vld.sshfl [vmem:[#allocation1] sm:$0xff pattern:$0x75316420]
        %v302 = vld.sshfl [vmem:[#allocation1 + $0x8] sm:$0xff pattern:$0x75316420]
        %305 = vrot.lane.b32.xlu0 %v301, 113
        %v306 = vpop.permute.xlu0 %305
        %307 = vrot.lane.b32.xlu0 %v302, 113
        %v308 = vpop.permute.xlu0 %307
        %vm309 = vcmp.lt.s32.totalorder %v248, 113
        %v310 = vsel %vm309, %v306, %v308
        %v311 = vsel %vm309, %v308, %v306
        %312 = vst [vmem:[#allocation1] ss:$2 sm:$0xff] %v236
        %v313 = vld.sshfl [vmem:[#allocation1] sm:$0xff pattern:$0x75316420]
        %v314 = vld.sshfl [vmem:[#allocation1 + $0x8] sm:$0xff pattern:$0x75316420]
        %317 = vrot.lane.b32.xlu0 %v313, 112
        %v318 = vpop.permute.xlu0 %317
        %319 = vrot.lane.b32.xlu0 %v314, 112
        %v320 = vpop.permute.xlu0 %319
        %vm321 = vcmp.lt.s32.totalorder %v248, 112
        %v322 = vsel %vm321, %v318, %v320
        %v323 = vsel %vm321, %v320, %v318
        %324 = vst [vmem:[#allocation1] ss:$2 sm:$0xff] %v236
        %v325 = vld.sshfl [vmem:[#allocation1] sm:$0xff pattern:$0x75316420]
        %v326 = vld.sshfl [vmem:[#allocation1 + $0x8] sm:$0xff pattern:$0x75316420]
        %329 = vrot.lane.b32.xlu0 %v325, 111
        %v330 = vpop.permute.xlu0 %329
        %331 = vrot.lane.b32.xlu0 %v326, 111
        %v332 = vpop.permute.xlu0 %331
        %vm333 = vcmp.lt.s32.totalorder %v248, 111
        %v334 = vsel %vm333, %v330, %v332
        %v335 = vsel %vm333, %v332, %v330
        %v338 = vrot.slane %v263, 4
        %v339 = vrot.slane %v262, 4
        %v344 = vrot.slane %v287, 4
        %v345 = vrot.slane %v286, 4
        %348 = vst [vmem:[#allocation1] ss:$2 sm:$0xff] %v236
        %v349 = vld.sshfl [vmem:[#allocation1] sm:$0xff pattern:$0x75316420]
        %v350 = vld.sshfl [vmem:[#allocation1 + $0x8] sm:$0xff pattern:$0x75316420]
        %v355 = vrot.slane %v298, 4
        %v356 = vrot.slane %v299, 4
        %v361 = vrot.slane %v322, 4
        %v362 = vrot.slane %v323, 4
        %vm365 = vcmask 1043456
        %v366 = vsel %vm365, %v251, %v338
        %v367 = vsel %vm365, %v250, %v339
        %v368 = vsel %vm365, %v275, %v344
        %v369 = vsel %vm365, %v274, %v345
        %v370 = vsel %vm365, %v349, %v355
        %v371 = vsel %vm365, %v350, %v356
        %v372 = vsel %vm365, %v310, %v361
        %v373 = vsel %vm365, %v311, %v362
        %v374 = vmul.f32 %v366, %v226
        %v375 = vmul.f32 %v367, %v227
        %v376 = vmul.f32 %v368, %v228
        %v377 = vmul.f32 %v369, %v229
        %v378 = vmul.f32 %v370, %v230
        %v379 = vmul.f32 %v371, %v231
        %v380 = vmul.f32 %v372, %v232
        %v381 = vmul.f32 %v373, %v233
        %v382 = vmul.f32 %v334, %v234
        %v383 = vmul.f32 %v335, %v235
        %vm384 = vcmask 293888
        %v386 = vsel %vm384, %v222, 0
        %v389 = vsel %vm384, %v223, 0
        %v392 = vsel %vm384, %v224, 0
        %v395 = vsel %vm384, %v225, 0
        %v398 = vsel %vm365, %v382, 0
        %v401 = vsel %vm365, %v383, 0
        %403 = vmatpush.msra.mxu0 0.0
        %404 = vmatpush.msra.mxu0 0.0
        %405 = vmatpush.msra.mxu0 0.0
        %406 = vmatpush.msra.mxu0 0.0
        %407 = vmatpush.msra.mxu0 0.0
        %408 = vmatpush.msra.mxu0 0.0
        %409 = vmatpush.msra.mxu0 0.0
        %410 = vmatpush.msra.mxu0 0.0
        %411 = vmatpush.msra.mxu0 0.0
        %412 = vmatpush.msra.mxu0 0.0
        %413 = vmatpush.msra.mxu0 0.0
        %414 = vmatpush.msra.mxu0 %v398
        %415 = vmatpush.msra.mxu0 %v380
        %416 = vmatpush.msra.mxu0 %v378
        %417 = vmatpush.msra.mxu0 %v376
        %418 = vmatpush.msra.mxu0 %v374
        %419 = vmatmul.f32.gmra.mxu0 %v386
        %v420 = vpop.f32.mrf.mxu0
        %v421 = vadd.f32 0.0, %v420
        %422 = vmatmul.f32.gmra.mxu0 %v389
        %v423 = vpop.f32.mrf.mxu0
        %v424 = vadd.f32 0.0, %v423
        %425 = vmatmul.f32.gmra.mxu0 %v392
        %v426 = vpop.f32.mrf.mxu0
        %v427 = vadd.f32 0.0, %v426
        %428 = vmatmul.f32.gmra.mxu0 %v395
        %v429 = vpop.f32.mrf.mxu0
        %v430 = vadd.f32 0.0, %v429
        %431 = vdwg.mxu0
        %432 = vmatpush.msra.mxu0 0.0
        %433 = vmatpush.msra.mxu0 0.0
        %434 = vmatpush.msra.mxu0 0.0
        %435 = vmatpush.msra.mxu0 0.0
        %436 = vmatpush.msra.mxu0 0.0
        %437 = vmatpush.msra.mxu0 0.0
        %438 = vmatpush.msra.mxu0 0.0
        %439 = vmatpush.msra.mxu0 0.0
        %440 = vmatpush.msra.mxu0 0.0
        %441 = vmatpush.msra.mxu0 0.0
        %442 = vmatpush.msra.mxu0 0.0
        %443 = vmatpush.msra.mxu0 %v401
        %444 = vmatpush.msra.mxu0 %v381
        %445 = vmatpush.msra.mxu0 %v379
        %446 = vmatpush.msra.mxu0 %v377
        %447 = vmatpush.msra.mxu0 %v375
        %448 = vmatmul.f32.gmra.mxu0 %v386
        %v449 = vpop.f32.mrf.mxu0
        %v450 = vadd.f32 0.0, %v449
        %451 = vmatmul.f32.gmra.mxu0 %v389
        %v452 = vpop.f32.mrf.mxu0
        %v453 = vadd.f32 0.0, %v452
        %454 = vmatmul.f32.gmra.mxu0 %v392
        %v455 = vpop.f32.mrf.mxu0
        %v456 = vadd.f32 0.0, %v455
        %457 = vmatmul.f32.gmra.mxu0 %v395
        %v458 = vpop.f32.mrf.mxu0
        %v459 = vadd.f32 0.0, %v458
        %460 = vdwg.mxu0
        %v461 = vadd.f32 %v421, %v450
        %462 = vadd.xlane.f32.xlu0 %v461
        %v463 = vpop.xlane.xlu0 %462
        %v464 = vadd.f32 %v424, %v453
        %465 = vadd.xlane.f32.xlu0 %v464
        %v466 = vpop.xlane.xlu0 %465
        %v467 = vadd.f32 %v427, %v456
        %468 = vadd.xlane.f32.xlu0 %v467
        %v469 = vpop.xlane.xlu0 %468
        %v470 = vadd.f32 %v430, %v459
        %471 = vadd.xlane.f32.xlu0 %v470
        %v472 = vpop.xlane.xlu0 %471
        %v473 = vmul.f32 %v463, 0.00390625
        %v474 = vmul.f32 %v466, 0.00390625
        %v475 = vmul.f32 %v469, 0.00390625
        %v476 = vmul.f32 %v472, 0.00390625
        %v477 = vmul.f32 %v421, %v421
        %v478 = vmul.f32 %v450, %v450
        %v479 = vmul.f32 %v424, %v424
        %v480 = vmul.f32 %v453, %v453
        %v481 = vmul.f32 %v427, %v427
        %v482 = vmul.f32 %v456, %v456
        %v483 = vmul.f32 %v430, %v430
        %v484 = vmul.f32 %v459, %v459
        %v485 = vadd.f32 %v477, %v478
        %486 = vadd.xlane.f32.xlu0 %v485
        %v487 = vpop.xlane.xlu0 %486
        %v488 = vadd.f32 %v479, %v480
        %489 = vadd.xlane.f32.xlu0 %v488
        %v490 = vpop.xlane.xlu0 %489
        %v491 = vadd.f32 %v481, %v482
        %492 = vadd.xlane.f32.xlu0 %v491
        %v493 = vpop.xlane.xlu0 %492
        %v494 = vadd.f32 %v483, %v484
        %495 = vadd.xlane.f32.xlu0 %v494
        %v496 = vpop.xlane.xlu0 %495
        %v497 = vmul.f32 %v487, 0.00390625
        %v498 = vmul.f32 %v490, 0.00390625
        %v499 = vmul.f32 %v493, 0.00390625
        %v500 = vmul.f32 %v496, 0.00390625
        %v501 = vmul.f32 %v473, %v473
        %v502 = vmul.f32 %v474, %v474
        %v503 = vmul.f32 %v475, %v475
        %v504 = vmul.f32 %v476, %v476
        %v505 = vsub.f32 %v497, %v501
        %v506 = vsub.f32 %v498, %v502
        %v507 = vsub.f32 %v499, %v503
        %v508 = vsub.f32 %v500, %v504
        %v509 = vmax.f32 %v505, 0.0
        %v510 = vmax.f32 %v506, 0.0
        %v511 = vmax.f32 %v507, 0.0
        %v512 = vmax.f32 %v508, 0.0
        %v513 = vsub.f32 %v421, %v473
        %v514 = vsub.f32 %v450, %v473
        %v515 = vsub.f32 %v424, %v474
        %v516 = vsub.f32 %v453, %v474
        %v517 = vsub.f32 %v427, %v475
        %v518 = vsub.f32 %v456, %v475
        %v519 = vsub.f32 %v430, %v476
        %v520 = vsub.f32 %v459, %v476
        %v521 = vadd.f32 %v509, 1e-05
        %v522 = vadd.f32 %v510, 1e-05
        %v523 = vadd.f32 %v511, 1e-05
        %v524 = vadd.f32 %v512, 1e-05
        %v525 = vrsqrt.pop %v521
        %v526 = vmul.f32 %v525, %v521
        %v527 = vmul.f32 %v526, %v525
        %v528 = vmul.f32 0.5, %v527
        %v529 = vsub.f32 1.5, %v528
        %v530 = vmul.f32 %v525, %v529
        %vm531 = vweird.f32 %v521
        %vm532 = vweird.f32 %v525
        %vm533 = vmor %vm531, %vm532
        %v534 = vsel %vm533, %v525, %v530
        %v535 = vrsqrt.pop %v522
        %v536 = vmul.f32 %v535, %v522
        %v537 = vmul.f32 %v536, %v535
        %v538 = vmul.f32 0.5, %v537
        %v539 = vsub.f32 1.5, %v538
        %v540 = vmul.f32 %v535, %v539
        %vm541 = vweird.f32 %v522
        %vm542 = vweird.f32 %v535
        %vm543 = vmor %vm541, %vm542
        %v544 = vsel %vm543, %v535, %v540
        %v545 = vrsqrt.pop %v523
        %v546 = vmul.f32 %v545, %v523
        %v547 = vmul.f32 %v546, %v545
        %v548 = vmul.f32 0.5, %v547
        %v549 = vsub.f32 1.5, %v548
        %v550 = vmul.f32 %v545, %v549
        %vm551 = vweird.f32 %v523
        %vm552 = vweird.f32 %v545
        %vm553 = vmor %vm551, %vm552
        %v554 = vsel %vm553, %v545, %v550
        %v555 = vrsqrt.pop %v524
        %v556 = vmul.f32 %v555, %v524
        %v557 = vmul.f32 %v556, %v555
        %v558 = vmul.f32 0.5, %v557
        %v559 = vsub.f32 1.5, %v558
        %v560 = vmul.f32 %v555, %v559
        %vm561 = vweird.f32 %v524
        %vm562 = vweird.f32 %v555
        %vm563 = vmor %vm561, %vm562
        %v564 = vsel %vm563, %v555, %v560
        %v565 = vmul.f32 %v513, %v534
        %v566 = vmul.f32 %v514, %v534
        %v567 = vmul.f32 %v515, %v544
        %v568 = vmul.f32 %v516, %v544
        %v569 = vmul.f32 %v517, %v554
        %v570 = vmul.f32 %v518, %v554
        %v571 = vmul.f32 %v519, %v564
        %v572 = vmul.f32 %v520, %v564
        %vm573 = vcmp.ge.f32.partialorder %v565, 0.0
        %vm574 = vcmp.ge.f32.partialorder %v566, 0.0
        %vm575 = vcmp.ge.f32.partialorder %v567, 0.0
        %vm576 = vcmp.ge.f32.partialorder %v568, 0.0
        %vm577 = vcmp.ge.f32.partialorder %v569, 0.0
        %vm578 = vcmp.ge.f32.partialorder %v570, 0.0
        %vm579 = vcmp.ge.f32.partialorder %v571, 0.0
        %vm580 = vcmp.ge.f32.partialorder %v572, 0.0
        %v581 = vmul.f32 %v565, 0.2
        %v582 = vmul.f32 %v566, 0.2
        %v583 = vmul.f32 %v567, 0.2
        %v584 = vmul.f32 %v568, 0.2
        %v585 = vmul.f32 %v569, 0.2
        %v586 = vmul.f32 %v570, 0.2
        %v587 = vmul.f32 %v571, 0.2
        %v588 = vmul.f32 %v572, 0.2
        %v589 = vsel %vm573, %v565, %v581
        %v590 = vsel %vm574, %v566, %v582
        %v591 = vsel %vm575, %v567, %v583
        %v592 = vsel %vm576, %v568, %v584
        %v593 = vsel %vm577, %v569, %v585
        %v594 = vsel %vm578, %v570, %v586
        %v595 = vsel %vm579, %v571, %v587
        %v596 = vsel %vm580, %v572, %v588
        %597 = vst [vmem:[%s221] sm:$0xff] %v589
        %598 = vst [vmem:[%s221 + $0x8] sm:$0xff] %v590
        %599 = vst [vmem:[%s221 + $0x10] sm:$0xff] %v591
        %600 = vst [vmem:[%s221 + $0x18] sm:$0xff] %v592
        %601 = vst [vmem:[%s221 + $0x20] sm:$0xff] %v593
        %602 = vst [vmem:[%s221 + $0x28] sm:$0xff] %v594
        %603 = vst [vmem:[%s221 + $0x30] sm:$0xff] %v595
        %604 = vst [vmem:[%s221 + $0x38] sm:$0xff] %v596
        %s605 = sand.u32 %s97, 1
        %s606 = scalar_lea.sflag [#allocation4], %s605
        %s607 = sand.u32 %s97, 1
        %s608 = smul.addr %s607, 64
        %s609 = scalar_lea.vmem [#allocation8], %s608
        // Predicated region
        $region45: #{tpu_custom_call.1} parent=31 // pred_check
          %p610 = pneg %p107
        $region46: #{tpu_custom_call.1} parent=31 // pred_check_branch
          %612 = sbr.rel (%p610) target = $region48
        $region47: #{tpu_custom_call.1} parent=31 // pred_region
          %614 = vsyncadd %s606, 0
          %s615 = smul.addr %s21, 8
          %s616 = smul.addr %s615, 8
          %s617 = scalar_lea.hbm %s3, %s616
          %s618 = sshll.u32 %s609, 4
          %s619 = int_to_ptr.vmem [resolvable:$true] %s618
          %s620 = sshll.u32 %s617, 4
          %s621 = int_to_ptr.hbm [resolvable:$true] %s620
          %626 = dma.vmem_to_hbm [thread:$0]  %s619, 1024, %s621, %s606, 256, 256, 16
        $region48: #{tpu_custom_call.1} parent=31 // pred_fallthru
          _
      $region32: #{tpu_custom_call.1} parent=5 // pred_fallthru
        _
      %p627 = scmp.le.s32.totalorder 2, %s16
      // Predicated region
      $region49: #{tpu_custom_call.1} parent=5 // pred_check
        %p628 = pneg %p627
      $region50: #{tpu_custom_call.1} parent=5 // pred_check_branch
        %630 = sbr.rel (%p628) target = $region52
      $region51: #{tpu_custom_call.1} parent=5 // pred_region
        %s631 = ssub.s32 %s16, 2
        // Predicated region
        $region53: #{tpu_custom_call.1} parent=51 // pred_check
          %p632 = pneg %p113
        $region54: #{tpu_custom_call.1} parent=51 // pred_check_branch
          %634 = sbr.rel (%p632) target = $region56
        $region55: #{tpu_custom_call.1} parent=51 // pred_region
          %s635 = sand.u32 %s98, 1
          %s636 = scalar_lea.sflag [#allocation4], %s635
          %s637 = sand.u32 %s98, 1
          %s638 = smul.addr %s637, 64
          %s639 = scalar_lea.vmem [#allocation8], %s638
          %641 = dma.done %s636, 1024
        $region56: #{tpu_custom_call.1} parent=51 // pred_fallthru
          _
      $region52: #{tpu_custom_call.1} parent=5 // pred_fallthru
        _
    $region6: #{tpu_custom_call.1} parent=1 // loop_footer
      %s20 = sadd.s32 1, %s16
    $region7: #{tpu_custom_call.1} parent=1 // loop_footer_branch
      %15 = sbr.rel target = $region3
    $region8: #{tpu_custom_call.1} parent=1 // loop_exit
      _
    %642 = vsyncpa [#allocation3], 1
    %s643 = scalar_lea.sflag [#allocation3], 1
    %644 = vsyncpa %s643, 1
    %645 = vsyncpa [#allocation6], 1
    %646 = vsyncpa [#allocation4], 1
    %s647 = scalar_lea.sflag [#allocation4], 1
    %648 = vsyncpa %s647, 1

</llo_original>
